<compile_context>
chip_gen: v5e
topology: v5e:2x2
jax: 0.10.0
libtpu: 0.0.40
codegen_flags: <defaults>
</compile_context>

<pallas_src>
import jax
import jax.numpy as jnp
from jax.experimental import pallas as pl
from jax.experimental.pallas import tpu as pltpu

_LANE = 128    # TPU vreg lane width (last-dim tile)
_SUBLANE = 8   # f32 sublane count (second-to-last-dim tile)


def _linear_nobias_kernel(x_ref, wt_ref, o_ref):
    # x_ref:  (B_pad, D_in)      VMEM
    # wt_ref: (D_in, D_out_pad)  VMEM  (pre-transposed at init time)
    # o_ref:  (B_pad, D_out_pad) VMEM  (lane-dense: D_out_pad % 128 == 0)
    #
    # Canonical (M,K)x(K,N) contraction straight on the MXU, f32 accumulation.
    o_ref[...] = jnp.dot(
        x_ref[...], wt_ref[...], preferred_element_type=jnp.float32
    )


def prepare_weight(weight):
    """One-time (init-time) prep of the PyTorch-layout (D_out, D_in) weight.

    1. Pads D_out up to a multiple of 128 with zero rows so the kernel's
       output last dim is lane-dense (unmasked full-lane stores).
    2. Transposes once to (D_in, D_out_pad) so the kernel performs a plain
       (M,K)x(K,N) MXU contraction with no per-call layout work.

    Both steps happen once, outside the per-call hot path.
    """
    d_out, _ = weight.shape
    d_out_pad = max(_LANE, pl.cdiv(d_out, _LANE) * _LANE)
    if d_out_pad != d_out:
        weight = jnp.pad(weight, ((0, d_out_pad - d_out), (0, 0)))
    return jnp.transpose(weight)  # (D_in, D_out_pad)


def linear_forward_padded(x, weight_t_padded):
    """Equivalent of Net.forward: x @ W.T (no bias), lane-dense output.

    x:                (B, D_in) float32
    weight_t_padded:  (D_in, D_out_pad) float32, output of prepare_weight()
    returns           (B, D_out_pad) float32; columns >= the true d_out are
                      exact zeros.  Slice at the *final* consumer (keeps the
                      lane-dense layout flowing and avoids one XLA op/call).
    """
    B, D_in = x.shape
    D_in_w, D_out_pad = weight_t_padded.shape
    assert D_in == D_in_w, "weight / input size mismatch"

    # Keep the batch sublane-aligned so loads/stores stay unmasked.
    # (Static decision at trace time; for B % 8 == 0 this adds no ops.)
    B_pad = max(_SUBLANE, pl.cdiv(B, _SUBLANE) * _SUBLANE)
    if B_pad != B:
        x = jnp.pad(x, ((0, B_pad - B), (0, 0)))

    flops = 2 * B_pad * D_in * D_out_pad
    bytes_accessed = 4 * (B_pad * D_in + D_in * D_out_pad + B_pad * D_out_pad)

    y_pad = pl.pallas_call(
        _linear_nobias_kernel,
        out_shape=jax.ShapeDtypeStruct((B_pad, D_out_pad), jnp.float32),
        # No grid: the whole problem is a single VMEM-resident block.
        in_specs=[
            pl.BlockSpec(memory_space=pltpu.MemorySpace.VMEM),
            pl.BlockSpec(memory_space=pltpu.MemorySpace.VMEM),
        ],
        out_specs=pl.BlockSpec(memory_space=pltpu.MemorySpace.VMEM),
        cost_estimate=pl.CostEstimate(
            flops=flops, transcendentals=0, bytes_accessed=bytes_accessed
        ),
    )(x, weight_t_padded)

    # Only strip the batch padding (no-op when B is already a multiple of 8);
    # the padded output columns intentionally stay attached.
    return y_pad if B_pad == B else y_pad[:B]


if __name__ == "__main__":
    # Small shapes consistent with a polynomial-regression MLP:
    # input_size = 4 polynomial features, output_size = 1, batch = 8.
    B, D_IN, D_OUT = 8, 4, 1

    key = jax.random.PRNGKey(0)
    kx, kw = jax.random.split(key)

    x = jax.random.normal(kx, (B, D_IN), dtype=jnp.float32)
    # Deterministic weight init (mimics nn.Linear's U(-1/sqrt(fan_in), ...)).
    bound = 1.0 / (D_IN ** 0.5)
    weight = jax.random.uniform(
        kw, (D_OUT, D_IN), dtype=jnp.float32, minval=-bound, maxval=bound
    )

    # Init-time prep (done once, not per forward call).
    weight_t_padded = prepare_weight(weight)

    y_pad = linear_forward_padded(x, weight_t_padded)
    y_pad = jax.block_until_ready(y_pad)

    # Final consumer: slice the real columns out exactly once, here.
    y = y_pad[:, :D_OUT]

    # Sanity-check against plain JAX reference (same semantics as PyTorch).
    y_ref = x @ weight.T
    assert y_pad.shape == (B, 128)
    assert y.shape == (B, D_OUT)
    assert jnp.allclose(y, y_ref, atol=1e-5, rtol=1e-5)
    # Padded columns must be exact zeros (zero weight rows).
    assert jnp.all(y_pad[:, D_OUT:] == 0.0)

    print("KERNEL_OK")
</pallas_src>

<mosaic_0001>
module attributes {stable_mosaic.version = 11 : i64} {
  func.func @_linear_nobias_kernel(%arg0: memref<8x4xf32, #tpu.memory_space<vmem>>, %arg1: memref<4x128xf32, #tpu.memory_space<vmem>>, %arg2: memref<8x128xf32, #tpu.memory_space<vmem>>) attributes {dimension_semantics = [], scalar_prefetch = 0 : i64, scratch_operands = 0 : i64, tpu.core_type = #tpu.core_type<tc>} {
    %c0 = arith.constant 0 : index
    %c0_0 = arith.constant 0 : index
    %0 = vector.load %arg0[%c0, %c0_0] : memref<8x4xf32, #tpu.memory_space<vmem>>, vector<8x4xf32>
    %c0_1 = arith.constant 0 : index
    %c0_2 = arith.constant 0 : index
    %1 = vector.load %arg1[%c0_1, %c0_2] : memref<4x128xf32, #tpu.memory_space<vmem>>, vector<4x128xf32>
    %cst = arith.constant dense<0.000000e+00> : vector<8x128xf32>
    %2 = tpu.matmul %0, %1, %cst {dimension_numbers = #tpu.dot_dimension_numbers<[1], [0], [0], [1], [0, 0, 1, 1], [], []>} : vector<8x4xf32>, vector<4x128xf32>, vector<8x128xf32> -> vector<8x128xf32>
    %c0_3 = arith.constant 0 : index
    %c0_4 = arith.constant 0 : index
    %3 = vector.load %arg2[%c0_3, %c0_4] : memref<8x128xf32, #tpu.memory_space<vmem>>, vector<8x128xf32>
    tpu.vector_store %arg2[%c0_3, %c0_4], %2 {strides = array<i32>} : memref<8x128xf32, #tpu.memory_space<vmem>>, vector<8x128xf32>,
    return
  }
}

</mosaic_0001>

<llo_original>
// kernel: tpu_custom_call.1
$region0: #{tpu_custom_call.1}
  #allocation0 [shape = 'u32[]', space=smem, size = 0x4, offset = 0x4, fixed_abs, tag = 'smem constant byte address 0x4 - core index']
  #allocation1 [shape = 'u32[72,128]{1,0:T(1,128)}', space=vmem, size = 0x9000, scoped, tag = 'internal scratch']
  %s0 = inlined_call_operand.vmem [shape: f32[8,4], index: 0, kind: input, shape index: {}]
  %s1 = inlined_call_operand.vmem [shape: f32[4,128], index: 1, kind: input, shape index: {}]
  %s2 = inlined_call_operand.hbm [shape: f32[8,128], index: 2, kind: output, shape index: {}]
  %s3 = sld [smem:[#allocation0]]
  $region18: #{tpu_custom_call.1} parent=0
    _
  %s5 = ssub.s32 1, %s3
  %s6 = scalar_select 0, %s5, %s3
  $region1: #{tpu_custom_call.1} parent=0
    #allocation2 [shape = 'u8[4096]{0}', space=vmem, size = 0x1000, scoped, tag = 'output window, operand 0, single buffered']
    #allocation3 [shape = 's32[1]{0}', space=sflag, size = 0x4, scoped, tag = 'scoped memory for tpu_custom_call.1']
    %7 = vsyncpa [#allocation3], 0
    // Predicated region
    $region2: #{tpu_custom_call.1} parent=1 // pred_check
      _
    $region3: #{tpu_custom_call.1} parent=1 // pred_check_branch
      %9 = sbr.rel (0) target = $region5
    $region4: #{tpu_custom_call.1} parent=1 // pred_region
      _
    $region5: #{tpu_custom_call.1} parent=1 // pred_fallthru
      _
    // Predicated region
    $region6: #{tpu_custom_call.1} parent=1 // pred_check
      _
    $region7: #{tpu_custom_call.1} parent=1 // pred_check_branch
      %11 = sbr.rel (0) target = $region9
    $region8: #{tpu_custom_call.1} parent=1 // pred_region
      _
    $region9: #{tpu_custom_call.1} parent=1 // pred_fallthru
      _
    %v12 = vld [vmem:[%s0] sm:$0xff]
    %v13 = vld [vmem:[%s1] sm:$0xf]
    %vm14 = vcmask 31744
    %v16 = vsel %vm14, %v12, 0
    %vm18 = vcmask 1043456
    %v20 = vsel %vm18, %v13, 0
    %22 = vmatpush.msra.mxu0 0.0
    %23 = vmatpush.msra.mxu0 0.0
    %24 = vmatpush.msra.mxu0 0.0
    %25 = vmatpush.msra.mxu0 0.0
    %26 = vmatpush.msra.mxu0 0.0
    %27 = vmatpush.msra.mxu0 0.0
    %28 = vmatpush.msra.mxu0 0.0
    %29 = vmatpush.msra.mxu0 0.0
    %30 = vmatpush.msra.mxu0 0.0
    %31 = vmatpush.msra.mxu0 0.0
    %32 = vmatpush.msra.mxu0 0.0
    %33 = vmatpush.msra.mxu0 0.0
    %34 = vmatpush.msra.mxu0 0.0
    %35 = vmatpush.msra.mxu0 0.0
    %36 = vmatpush.msra.mxu0 0.0
    %37 = vmatpush.msra.mxu0 %v20
    %38 = vmatmul.f32.gmra.mxu0 %v16
    %v39 = vpop.f32.mrf.mxu0
    %v40 = vadd.f32 0.0, %v39
    %41 = vdwg.mxu0
    %42 = vst [vmem:[#allocation2] sm:$0xff] %v40
    // Predicated region
    $region10: #{tpu_custom_call.1} parent=1 // pred_check
      _
    $region11: #{tpu_custom_call.1} parent=1 // pred_check_branch
      %44 = sbr.rel (0) target = $region13
    $region12: #{tpu_custom_call.1} parent=1 // pred_region
      %46 = vsyncadd [#allocation3], 0
      %s48 = sshll.u32 [#allocation2], 4
      %s49 = int_to_ptr.vmem [resolvable:$true] %s48
      %s50 = sshll.u32 %s2, 4
      %s51 = int_to_ptr.hbm [resolvable:$true] %s50
      %53 = dma.vmem_to_hbm [thread:$0]  %s49, 128, %s51, [#allocation3]
    $region13: #{tpu_custom_call.1} parent=1 // pred_fallthru
      _
    // Predicated region
    $region14: #{tpu_custom_call.1} parent=1 // pred_check
      _
    $region15: #{tpu_custom_call.1} parent=1 // pred_check_branch
      %55 = sbr.rel (0) target = $region17
    $region16: #{tpu_custom_call.1} parent=1 // pred_region
      %57 = dma.done [#allocation3], 128
    $region17: #{tpu_custom_call.1} parent=1 // pred_fallthru
      _
    %58 = vsyncpa [#allocation3], 1

</llo_original>
